<compile_context>
chip_gen: v6e
topology: v6e:2x2x1
jax: 0.10.0
libtpu: 0.0.40
codegen_flags: <defaults>
</compile_context>

<pallas_src>
import functools

import jax
import jax.numpy as jnp
from jax import lax
from jax.experimental import pallas as pl
from jax.experimental.pallas import tpu as pltpu

LANES = 128
SUBLANES = 8
MAX_BLOCK_ROWS = 8192   # 8192 * 128 * 4 B = 4 MiB per f32 input block
CHUNK_ROWS = 512        # in-kernel accumulation chunk (bounds live ranges)


def _round_up(x, m):
    return ((x + m - 1) // m) * m


def _detect_cores():
    """Leading grid-axis size + dimension semantics tag for this chip."""
    try:
        kind = jax.devices()[0].device_kind.lower()
    except Exception:
        return 1, "arbitrary"
    if "v7" in kind:
        # 2 TensorCores per chip: shard the leading axis across them.
        # (Each TC has private VMEM, so acc_ref scratch is per-core by construction.)
        return 2, "core_parallel"
    # v5e / v6e are single-TensorCore: drop the core axis (review guidance).
    return 1, "arbitrary"


# -----------------------------------------------------------------------------
# Pallas kernel: sum(fisher_half * (p - mean)^2) over tiled (rows, 128) slabs
# (the 0.5 EWC factor is pre-folded into the fisher slab)
# -----------------------------------------------------------------------------
def _make_kernel(block_rows, chunk_rows):
    n_chunks = block_rows // chunk_rows

    def kernel(p_ref, mean_ref, fisher_ref, out_ref, acc_ref):
        i = pl.program_id(1)  # reduction ("arbitrary") axis

        @pl.when(i == 0)
        def _init():
            acc_ref[...] = jnp.zeros_like(acc_ref)

        def chunk_body(c, carry):
            r0 = pl.multiple_of(c * chunk_rows, chunk_rows)
            p = p_ref[pl.ds(r0, chunk_rows), :].astype(jnp.float32)
            m = mean_ref[pl.ds(r0, chunk_rows), :].astype(jnp.float32)
            f = fisher_ref[pl.ds(r0, chunk_rows), :].astype(jnp.float32)
            d = p - m
            prod = f * d * d                                   # (chunk_rows, 128) VPU
            # Fold chunk rows into the vreg-shaped (8, 128) accumulator with pure
            # elementwise VPU adds; no cross-lane work in the hot loop.
            acc_ref[...] += jnp.sum(prod.reshape(-1, SUBLANES, LANES), axis=0)
            return carry

        lax.fori_loop(0, n_chunks, chunk_body, 0, unroll=True)

        @pl.when(i == pl.num_programs(1) - 1)
        def _finalize():
            # One sublane reduction per core; lane partials are summed in the
            # wrapper (lane-dense (1, 128) output slot per core).
            out_ref[...] = jnp.sum(acc_ref[...], axis=0, keepdims=True)

    return kernel


def _ewc_loss_fwd_impl(p_slab, mean_slab, fisher_slab, block_rows, chunk_rows,
                       num_cores, sem_tag):
    rows = p_slab.shape[0]
    assert rows % (num_cores * block_rows) == 0
    steps = rows // (num_cores * block_rows)

    in_spec = pl.BlockSpec((block_rows, LANES),
                           lambda c, i: (c * steps + i, 0))
    out_spec = pl.BlockSpec((1, LANES), lambda c, i: (0, c))

    # Double-buffered input bytes (actual dtypes) + headroom for the chunked
    # intermediates / accumulator / output; capped below the v7x VMEM budget.
    buf_bytes = sum(2 * block_rows * LANES * jnp.dtype(x.dtype).itemsize
                    for x in (p_slab, mean_slab, fisher_slab))
    vmem_limit = int(min(48 * 1024 * 1024,
                         max(16 * 1024 * 1024, buf_bytes + 4 * 1024 * 1024)))

    if sem_tag == "core_parallel":
        semantics = (pltpu.CORE_PARALLEL, pltpu.ARBITRARY)
    else:
        semantics = ("arbitrary", "arbitrary")

    partials = pl.pallas_call(
        _make_kernel(block_rows, chunk_rows),
        out_shape=jax.ShapeDtypeStruct((1, num_cores * LANES), jnp.float32),
        grid_spec=pltpu.PrefetchScalarGridSpec(
            num_scalar_prefetch=0,
            grid=(num_cores, steps),
            in_specs=[in_spec, in_spec, in_spec],
            out_specs=out_spec,
            scratch_shapes=[pltpu.VMEM((SUBLANES, LANES), jnp.float32)],
        ),
        compiler_params=pltpu.CompilerParams(
            dimension_semantics=semantics,
            vmem_limit_bytes=vmem_limit,
        ),
    )(p_slab, mean_slab, fisher_slab)
    return jnp.sum(partials)


# -----------------------------------------------------------------------------
# custom_vjp wrapper: pallas_call has no autodiff rule; EWC loss is typically
# differentiated w.r.t. the live params, so provide grad_p = F * (p - mean).
# -----------------------------------------------------------------------------
@functools.partial(jax.custom_vjp, nondiff_argnums=(3, 4, 5, 6))
def ewc_loss_pallas(p_slab, mean_slab, fisher_slab, block_rows, chunk_rows,
                    num_cores, sem_tag):
    return _ewc_loss_fwd_impl(p_slab, mean_slab, fisher_slab, block_rows,
                              chunk_rows, num_cores, sem_tag)


def _ewc_vjp_fwd(p_slab, mean_slab, fisher_slab, block_rows, chunk_rows,
                 num_cores, sem_tag):
    loss = _ewc_loss_fwd_impl(p_slab, mean_slab, fisher_slab, block_rows,
                              chunk_rows, num_cores, sem_tag)
    return loss, (p_slab, mean_slab, fisher_slab)


def _ewc_vjp_bwd(block_rows, chunk_rows, num_cores, sem_tag, res, g):
    # TODO(synk): this elementwise bwd could also be a trivial streaming Pallas
    # kernel; XLA already fuses it into one mem-bound pass, so it stays in JAX.
    p_slab, mean_slab, fisher_slab = res
    p = p_slab.astype(jnp.float32)
    m = mean_slab.astype(jnp.float32)
    fh = fisher_slab.astype(jnp.float32)   # already contains the 0.5 factor
    d = p - m
    dp = (2.0 * g) * fh * d                # = g * F * (p - mean)
    return (dp.astype(p_slab.dtype),
            (-dp).astype(mean_slab.dtype),
            (g * d * d).astype(fisher_slab.dtype))


ewc_loss_pallas.defvjp(_ewc_vjp_fwd, _ewc_vjp_bwd)


# -----------------------------------------------------------------------------
# Glue: slab planning / flattening
# -----------------------------------------------------------------------------
def _plan_padding(n_elems, num_cores, max_block_rows=MAX_BLOCK_ROWS,
                  chunk_rows=CHUNK_ROWS):
    """Pick (block_rows, chunk_rows, padded_rows) with
    padded_rows == num_cores * steps * block_rows and block_rows % chunk == 0."""
    rows_needed = -(-n_elems // LANES)
    rows_per_core = -(-rows_needed // num_cores)
    if rows_per_core <= chunk_rows:
        block_rows = max(SUBLANES, _round_up(rows_per_core, SUBLANES))
        chunk = block_rows
    else:
        block_rows = min(max_block_rows, _round_up(rows_per_core, chunk_rows))
        chunk = chunk_rows
    steps = max(1, -(-rows_needed // (num_cores * block_rows)))
    padded_rows = num_cores * steps * block_rows
    return block_rows, chunk, padded_rows


def _flatten_and_pad(tree, key_order, padded_rows, dtype=jnp.float32, scale=1.0):
    """Flatten dict-of-arrays (fixed key order) into a zero-padded (rows,128) slab."""
    flat = jnp.concatenate([jnp.ravel(tree[k]).astype(jnp.float32)
                            for k in key_order])
    if scale != 1.0:
        flat = flat * scale
    pad = padded_rows * LANES - flat.shape[0]
    flat = jnp.pad(flat, (0, pad))          # zero pad: padded fisher=0 contributes 0
    return flat.reshape(padded_rows, LANES).astype(dtype)


# One jitted dispatch for the whole ewc_loss path (flatten + pad + kernel):
# removes the eager per-call concat/pad op soup flagged in the review.
@functools.partial(jax.jit, static_argnums=(3, 4, 5, 6, 7, 8))
def _ewc_loss_path(params, prev_slab, fisher_slab, key_order, padded_rows,
                   block_rows, chunk_rows, num_cores, sem_tag):
    p_slab = _flatten_and_pad(params, key_order, padded_rows, jnp.float32)
    return ewc_loss_pallas(p_slab, prev_slab, fisher_slab, block_rows,
                           chunk_rows, num_cores, sem_tag)


# -----------------------------------------------------------------------------
# JAX-side ContinualLearner analogue
# -----------------------------------------------------------------------------
class ContinualLearner:
    def __init__(self, params, slab_dtype=jnp.float32):
        self.params = params            # dict name -> jnp array (requires_grad params)
        self.ewc_lambda = 0.0           # stored only; trainer applies it (as in PyTorch)
        self.fisher_n = None
        self.b_s = 1
        self.EWC_task_count = 0
        self.est_fisher_info = {}
        self.prev_task_info = {}
        self.fisher = None
        self.prev_task = None
        self._slab_dtype = slab_dtype   # bf16 here halves cached-slab HBM traffic
        self._key_order = tuple(sorted(params.keys()))
        self._num_cores, self._sem_tag = _detect_cores()
        n_elems = sum(int(params[k].size) for k in self._key_order)
        self._block_rows, self._chunk_rows, self._padded_rows = _plan_padding(
            n_elems, self._num_cores)
        self._fisher_half_slab = None
        self._prev_slab = None

    # TODO(synk): forward() is abstract (`pass`) in the PyTorch module; subclasses
    # define it, so there is no forward compute to translate here.
    # TODO(synk): estimate_fisher() drives a DataLoader + backward() over the
    # abstract forward; it stays host-side training-loop code, not a kernel.

    def get_info(self, diz, ewc_lambda):
        self.fisher = diz["fisher"]
        self.prev_task = diz["prev_task"]
        self.ewc_lambda = ewc_lambda
        # Cache the two slabs that do not change between ewc_loss() calls; fold
        # the EWC 1/2 factor into the fisher slab (free at get_info time).
        self._prev_slab = _flatten_and_pad(
            self.prev_task, self._key_order, self._padded_rows, self._slab_dtype)
        self._fisher_half_slab = _flatten_and_pad(
            self.fisher, self._key_order, self._padded_rows, self._slab_dtype,
            scale=0.5)

    def ewc_loss(self, params=None):
        if self.EWC_task_count > 0:
            params = self.params if params is None else params
            try:
                return _ewc_loss_path(params, self._prev_slab,
                                      self._fisher_half_slab, self._key_order,
                                      self._padded_rows, self._block_rows,
                                      self._chunk_rows, self._num_cores,
                                      self._sem_tag)
            except Exception:
                # Graceful fallback if CORE_PARALLEL lowering is unavailable on
                # this chip/toolchain: same grid, sequential semantics.
                return _ewc_loss_path(params, self._prev_slab,
                                      self._fisher_half_slab, self._key_order,
                                      self._padded_rows, self._block_rows,
                                      self._chunk_rows, self._num_cores,
                                      "arbitrary")
        return jnp.float32(0.0)


# -----------------------------------------------------------------------------
# Reference (pure JAX) for validation
# -----------------------------------------------------------------------------
def ewc_loss_ref(params, prev_task, fisher):
    total = jnp.float32(0.0)
    for n in params:
        d = params[n].astype(jnp.float32) - prev_task[n].astype(jnp.float32)
        total = total + jnp.sum(fisher[n].astype(jnp.float32) * d * d)
    return 0.5 * total


if __name__ == "__main__":
    key = jax.random.PRNGKey(0)
    ks = jax.random.split(key, 12)

    # Deterministic synthetic parameter set (what a small concrete subclass would
    # own): a conv layer (NCHW weights) and a linear head.
    params = {
        "conv.weight": jax.random.normal(ks[0], (8, 4, 3, 3), jnp.float32) * 0.1,
        "conv.bias":   jax.random.normal(ks[1], (8,), jnp.float32) * 0.1,
        "fc.weight":   jax.random.normal(ks[2], (10, 32), jnp.float32) * 0.1,
        "fc.bias":     jax.random.normal(ks[3], (10,), jnp.float32) * 0.1,
    }
    prev_task = {
        "conv.weight": params["conv.weight"] + 0.05 * jax.random.normal(ks[4], (8, 4, 3, 3)),
        "conv.bias":   params["conv.bias"]   + 0.05 * jax.random.normal(ks[5], (8,)),
        "fc.weight":   params["fc.weight"]   + 0.05 * jax.random.normal(ks[6], (10, 32)),
        "fc.bias":     params["fc.bias"]     + 0.05 * jax.random.normal(ks[7], (10,)),
    }
    fisher = {
        "conv.weight": jnp.abs(jax.random.normal(ks[8], (8, 4, 3, 3))),
        "conv.bias":   jnp.abs(jax.random.normal(ks[9], (8,))),
        "fc.weight":   jnp.abs(jax.random.normal(ks[10], (10, 32))),
        "fc.bias":     jnp.abs(jax.random.normal(ks[11], (10,))),
    }

    learner = ContinualLearner(params)
    learner.get_info({"fisher": fisher, "prev_task": prev_task}, ewc_lambda=1.0)
    learner.EWC_task_count = 1

    # Forward value vs. reference.
    loss = learner.ewc_loss()
    jax.block_until_ready(loss)
    ref = ewc_loss_ref(params, prev_task, fisher)
    jax.block_until_ready(ref)
    assert jnp.allclose(loss, ref, rtol=1e-5, atol=1e-5), (loss, ref)

    # Gradient w.r.t. live params (custom_vjp): dL/dp = fisher * (p - prev_mean).
    grads = jax.grad(lambda p: learner.ewc_loss(p))(params)
    jax.block_until_ready(grads)
    for n in params:
        gref = fisher[n] * (params[n] - prev_task[n])
        assert jnp.allclose(grads[n], gref, rtol=1e-5, atol=1e-5), n

    # Optional bf16 cached slabs (review's bandwidth optimization): looser check.
    learner_bf16 = ContinualLearner(params, slab_dtype=jnp.bfloat16)
    learner_bf16.get_info({"fisher": fisher, "prev_task": prev_task}, ewc_lambda=1.0)
    learner_bf16.EWC_task_count = 1
    loss_bf16 = learner_bf16.ewc_loss()
    jax.block_until_ready(loss_bf16)
    assert abs(float(loss_bf16) - float(ref)) <= 0.05 * abs(float(ref)) + 1e-4, (
        loss_bf16, ref)

    # Also exercise the EWC_task_count == 0 branch (returns 0.0).
    learner.EWC_task_count = 0
    zero = learner.ewc_loss()
    jax.block_until_ready(zero)
    assert float(zero) == 0.0

    print("KERNEL_OK")
</pallas_src>

<mosaic_0001>
module attributes {stable_mosaic.version = 11 : i64} {
  func.func @kernel(%arg0: i32, %arg1: i32, %arg2: memref<8x128xf32, #tpu.memory_space<vmem>>, %arg3: memref<8x128xf32, #tpu.memory_space<vmem>>, %arg4: memref<8x128xf32, #tpu.memory_space<vmem>>, %arg5: memref<1x128xf32, #tpu.memory_space<vmem>>, %arg6: memref<8x128xf32, #tpu.memory_space<vmem>>) attributes {dimension_semantics = [#tpu.dimension_semantics<arbitrary>, #tpu.dimension_semantics<arbitrary>], iteration_bounds = array<i64: 1, 1>, scalar_prefetch = 0 : i64, scratch_operands = 1 : i64, tpu.core_type = #tpu.core_type<tc>, window_params = [{transform_indices = @transform_0, window_bounds = array<i64: 8, 128>}, {transform_indices = @transform_1, window_bounds = array<i64: 8, 128>}, {transform_indices = @transform_2, window_bounds = array<i64: 8, 128>}, {transform_indices = @transform_3, window_bounds = array<i64: 1, 128>}]} {
    %c0_i32 = arith.constant 0 : i32
    %0 = arith.cmpi eq, %arg1, %c0_i32 : i32
    %1 = arith.extui %0 : i1 to i32
    %c0_i32_0 = arith.constant 0 : i32
    %2 = arith.cmpi ne, %1, %c0_i32_0 : i32
    scf.if %2 {
      %cst_10 = arith.constant 0.000000e+00 : f32
      %22 = vector.broadcast %cst_10 : f32 to vector<8x128xf32>
      %c0_11 = arith.constant 0 : index
      %c0_12 = arith.constant 0 : index
      %23 = vector.load %arg6[%c0_11, %c0_12] : memref<8x128xf32, #tpu.memory_space<vmem>>, vector<8x128xf32>
      tpu.vector_store %arg6[%c0_11, %c0_12], %22 {strides = array<i32>} : memref<8x128xf32, #tpu.memory_space<vmem>>, vector<8x128xf32>,
    } else {
    }
    %c0_i32_1 = arith.constant 0 : i32
    %c8_i32 = arith.constant 8 : i32
    %3 = arith.muli %c0_i32_1, %c8_i32 : i32
    %4 = tpu.assume_multiple %3, 8 : i32
    %5 = arith.index_cast %4 : i32 to index
    %c0 = arith.constant 0 : index
    %6 = vector.load %arg2[%5, %c0] : memref<8x128xf32, #tpu.memory_space<vmem>>, vector<8x128xf32>
    %7 = arith.index_cast %4 : i32 to index
    %c0_2 = arith.constant 0 : index
    %8 = vector.load %arg3[%7, %c0_2] : memref<8x128xf32, #tpu.memory_space<vmem>>, vector<8x128xf32>
    %9 = arith.index_cast %4 : i32 to index
    %c0_3 = arith.constant 0 : index
    %10 = vector.load %arg4[%9, %c0_3] : memref<8x128xf32, #tpu.memory_space<vmem>>, vector<8x128xf32>
    %11 = arith.subf %6, %8 : vector<8x128xf32>
    %12 = arith.mulf %10, %11 : vector<8x128xf32>
    %13 = arith.mulf %12, %11 : vector<8x128xf32>
    %c0_4 = arith.constant 0 : index
    %c0_5 = arith.constant 0 : index
    %14 = vector.load %arg6[%c0_4, %c0_5] : memref<8x128xf32, #tpu.memory_space<vmem>>, vector<8x128xf32>
    %15 = vector.shape_cast %13 : vector<8x128xf32> to vector<1x8x128xf32>
    %cst = arith.constant dense<0.000000e+00> : vector<8x128xf32>
    %16 = vector.multi_reduction <add>, %15, %cst [0] : vector<1x8x128xf32> to vector<8x128xf32>
    %17 = arith.addf %14, %16 : vector<8x128xf32>
    %c0_6 = arith.constant 0 : index
    %c0_7 = arith.constant 0 : index
    %18 = vector.load %arg6[%c0_6, %c0_7] : memref<8x128xf32, #tpu.memory_space<vmem>>, vector<8x128xf32>
    tpu.vector_store %arg6[%c0_6, %c0_7], %17 {strides = array<i32>} : memref<8x128xf32, #tpu.memory_space<vmem>>, vector<8x128xf32>,
    %c1_i32 = arith.constant 1 : i32
    %c0_i32_8 = arith.constant 0 : i32
    %19 = arith.cmpi eq, %arg1, %c0_i32_8 : i32
    %20 = arith.extui %19 : i1 to i32
    %c0_i32_9 = arith.constant 0 : i32
    %21 = arith.cmpi ne, %20, %c0_i32_9 : i32
    scf.if %21 {
      %c0_10 = arith.constant 0 : index
      %c0_11 = arith.constant 0 : index
      %22 = vector.load %arg6[%c0_10, %c0_11] : memref<8x128xf32, #tpu.memory_space<vmem>>, vector<8x128xf32>
      %cst_12 = arith.constant dense<0.000000e+00> : vector<128xf32>
      %23 = vector.multi_reduction <add>, %22, %cst_12 [0] : vector<8x128xf32> to vector<128xf32>
      %24 = vector.shape_cast %23 : vector<128xf32> to vector<1x128xf32>
      %c0_13 = arith.constant 0 : index
      %c0_14 = arith.constant 0 : index
      %25 = vector.load %arg5[%c0_13, %c0_14] : memref<1x128xf32, #tpu.memory_space<vmem>>, vector<1x128xf32>
      tpu.vector_store %arg5[%c0_13, %c0_14], %24 {strides = array<i32>} : memref<1x128xf32, #tpu.memory_space<vmem>>, vector<1x128xf32>,
    } else {
    }
    return
  }
  func.func @transform_0(%arg0: i32, %arg1: i32) -> (i32, i32) {
    %c1_i32 = arith.constant 1 : i32
    %0 = arith.muli %arg0, %c1_i32 : i32
    %1 = arith.addi %0, %arg1 : i32
    %c0_i32 = arith.constant 0 : i32
    %c0_i32_0 = arith.constant 0 : i32
    return %1, %c0_i32 : i32, i32
  }
  func.func @transform_1(%arg0: i32, %arg1: i32) -> (i32, i32) {
    %c1_i32 = arith.constant 1 : i32
    %0 = arith.muli %arg0, %c1_i32 : i32
    %1 = arith.addi %0, %arg1 : i32
    %c0_i32 = arith.constant 0 : i32
    %c0_i32_0 = arith.constant 0 : i32
    return %1, %c0_i32 : i32, i32
  }
  func.func @transform_2(%arg0: i32, %arg1: i32) -> (i32, i32) {
    %c1_i32 = arith.constant 1 : i32
    %0 = arith.muli %arg0, %c1_i32 : i32
    %1 = arith.addi %0, %arg1 : i32
    %c0_i32 = arith.constant 0 : i32
    %c0_i32_0 = arith.constant 0 : i32
    return %1, %c0_i32 : i32, i32
  }
  func.func @transform_3(%arg0: i32, %arg1: i32) -> (i32, i32) {
    %c0_i32 = arith.constant 0 : i32
    %c0_i32_0 = arith.constant 0 : i32
    return %c0_i32, %arg0 : i32, i32
  }
}

</mosaic_0001>

<llo_original>
// kernel: _ewc_loss_path.1
$region0: #{_ewc_loss_path.1}
  #allocation0 [shape = 'u32[]', space=smem, size = 0x4, offset = 0x4, fixed_abs, tag = 'smem constant byte address 0x4 - core index']
  #allocation1 [shape = 'u32[144,128]{1,0:T(1,128)}', space=vmem, size = 0x12000, scoped, tag = 'internal scratch']
  #allocation2 [shape = 'f32[8,128]{1,0:T(8,128)}', space=vmem, size = 0x1000, scoped, tag = 'scratch operand']
  %s0 = inlined_call_operand.vmem [shape: f32[8,128], index: 0, kind: input, shape index: {}]
  %s1 = inlined_call_operand.vmem [shape: f32[8,128], index: 1, kind: input, shape index: {}]
  %s2 = inlined_call_operand.vmem [shape: f32[8,128], index: 2, kind: input, shape index: {}]
  %s3 = inlined_call_operand.vmem [shape: f32[1,128], index: 3, kind: output, shape index: {}]
  %s4 = sld [smem:[#allocation0]]
  $region30: #{_ewc_loss_path.1} parent=0
    _
  %s6 = ssub.s32 1, %s4
  %s7 = scalar_select 0, %s6, %s4
  // Predicated region
  $region2: #{_ewc_loss_path.1} parent=0 // pred_check
    _
  $region3: #{_ewc_loss_path.1} parent=0 // pred_check_branch
    %9 = sbr.rel (0) target = $region5
  $region4: #{_ewc_loss_path.1} parent=0 // pred_region
    %s10 = sadd.s32 0, 0
    %p11 = scmp.lt.s32.totalorder %s10, 0
    %s12 = scalar_select %p11, %s10, 0
    %s13 = smul.addr %s12, 8
    %s14 = scalar_lea.vmem %s0, %s13
    %s15 = sadd.s32 0, 0
  $region5: #{_ewc_loss_path.1} parent=0 // pred_fallthru
    _
  // Predicated region
  $region6: #{_ewc_loss_path.1} parent=0 // pred_check
    _
  $region7: #{_ewc_loss_path.1} parent=0 // pred_check_branch
    %17 = sbr.rel (0) target = $region9
  $region8: #{_ewc_loss_path.1} parent=0 // pred_region
    %s18 = sadd.s32 0, 0
    %p19 = scmp.lt.s32.totalorder %s18, 0
    %s20 = scalar_select %p19, %s18, 0
    %s21 = smul.addr %s20, 8
    %s22 = scalar_lea.vmem %s1, %s21
    %s23 = sadd.s32 0, 0
  $region9: #{_ewc_loss_path.1} parent=0 // pred_fallthru
    _
  // Predicated region
  $region10: #{_ewc_loss_path.1} parent=0 // pred_check
    _
  $region11: #{_ewc_loss_path.1} parent=0 // pred_check_branch
    %25 = sbr.rel (0) target = $region13
  $region12: #{_ewc_loss_path.1} parent=0 // pred_region
    %s26 = sadd.s32 0, 0
    %p27 = scmp.lt.s32.totalorder %s26, 0
    %s28 = scalar_select %p27, %s26, 0
    %s29 = smul.addr %s28, 8
    %s30 = scalar_lea.vmem %s2, %s29
    %s31 = sadd.s32 0, 0
  $region13: #{_ewc_loss_path.1} parent=0 // pred_fallthru
    _
  %s32 = sadd.s32 0, 0
  %p33 = scmp.lt.s32.totalorder %s32, 0
  %s34 = scalar_select %p33, %s32, 0
  %s35 = smul.addr %s34, 8
  %s36 = scalar_lea.vmem %s0, %s35
  %s37 = sadd.s32 0, 0
  %p38 = scmp.lt.s32.totalorder %s37, 0
  %s39 = scalar_select %p38, %s37, 0
  %s40 = smul.addr %s39, 8
  %s41 = scalar_lea.vmem %s1, %s40
  %s42 = sadd.s32 0, 0
  %p43 = scmp.lt.s32.totalorder %s42, 0
  %s44 = scalar_select %p43, %s42, 0
  %s45 = smul.addr %s44, 8
  %s46 = scalar_lea.vmem %s2, %s45
  %s47 = sadd.s32 0, 0
  %p48 = scmp.lt.s32.totalorder %s47, 0
  %s49 = scalar_select %p48, %s47, 0
  %s50 = smul.addr %s49, 8
  %s51 = scalar_lea.vmem %s0, %s50
  %s52 = sadd.s32 0, 0
  %s53 = sadd.s32 0, 0
  %p54 = scmp.lt.s32.totalorder %s53, 0
  %s55 = scalar_select %p54, %s53, 0
  %s56 = smul.addr %s55, 8
  %s57 = scalar_lea.vmem %s1, %s56
  %s58 = sadd.s32 0, 0
  %s59 = sadd.s32 0, 0
  %p60 = scmp.lt.s32.totalorder %s59, 0
  %s61 = scalar_select %p60, %s59, 0
  %s62 = smul.addr %s61, 8
  %s63 = scalar_lea.vmem %s2, %s62
  %s64 = sadd.s32 0, 0
  %p65 = scmp.eq.s32.totalorder 0, 0
  // Predicated region
  $region14: #{_ewc_loss_path.1} parent=0 // pred_check
    %p66 = pneg %p65
  $region15: #{_ewc_loss_path.1} parent=0 // pred_check_branch
    %68 = sbr.rel (%p66) target = $region17
  $region16: #{_ewc_loss_path.1} parent=0 // pred_region
    %69 = vst [vmem:[#allocation2] sm:$0xff] 0.0
  $region17: #{_ewc_loss_path.1} parent=0 // pred_fallthru
    _
  %v70 = vld [vmem:[%s51] sm:$0xff]
  %v71 = vld [vmem:[%s57] sm:$0xff]
  %v72 = vld [vmem:[%s63] sm:$0xff]
  %v73 = vsub.f32 %v70, %v71
  %v74 = vmul.f32 %v72, %v73
  %v75 = vmul.f32 %v74, %v73
  %v76 = vld [vmem:[#allocation2] sm:$0xff]
  %v77 = vadd.f32 %v75, 0.0
  %v78 = vadd.f32 %v76, %v77
  %79 = vst [vmem:[#allocation2] sm:$0xff] %v78
  // Predicated region
  $region18: #{_ewc_loss_path.1} parent=0 // pred_check
    %p80 = pneg %p65
  $region19: #{_ewc_loss_path.1} parent=0 // pred_check_branch
    %82 = sbr.rel (%p80) target = $region21
  $region20: #{_ewc_loss_path.1} parent=0 // pred_region
    %v83 = vld [vmem:[#allocation2] sm:$0xff]
    %v84 = vrot.slane %v83, 4
    %v85 = vadd.f32 %v83, %v84
    %v86 = vrot.slane %v85, 2
    %v87 = vadd.f32 %v85, %v86
    %v88 = vrot.slane %v87, 1
    %v89 = vadd.f32 %v87, %v88
    %90 = vst [vmem:[%s3] sm:$0x1] %v89
  $region21: #{_ewc_loss_path.1} parent=0 // pred_fallthru
    _
  // Predicated region
  $region22: #{_ewc_loss_path.1} parent=0 // pred_check
    _
  $region23: #{_ewc_loss_path.1} parent=0 // pred_check_branch
    %92 = sbr.rel (0) target = $region25
  $region24: #{_ewc_loss_path.1} parent=0 // pred_region
    _
  $region25: #{_ewc_loss_path.1} parent=0 // pred_fallthru
    _
  // Predicated region
  $region26: #{_ewc_loss_path.1} parent=0 // pred_check
    _
  $region27: #{_ewc_loss_path.1} parent=0 // pred_check_branch
    %94 = sbr.rel (0) target = $region29
  $region28: #{_ewc_loss_path.1} parent=0 // pred_region
    _
  $region29: #{_ewc_loss_path.1} parent=0 // pred_fallthru
    _

</llo_original>
